<compile_context>
chip_gen: v6e
topology: v6e:2x2x1
jax: 0.10.0
libtpu: 0.0.40
codegen_flags: <defaults>
</compile_context>

<pallas_src>
import functools
import math

import jax
import jax.numpy as jnp
from jax.experimental import pallas as pl
from jax.experimental.pallas import tpu as pltpu

HIDDEN = 128


def _round_up(n, m):
    return ((n + m - 1) // m) * m


def q_mlp_kernel(x_ref, w1_ref, b1_ref, w2_ref, b2_ref, w3_ref, b3_ref, o_ref):
    """Fused 3-layer MLP on one batch tile.

    Dot inputs use the weight dtype (f32 or bf16); accumulation and all
    elementwise math (bias add, relu) stay in f32.
    """
    w_dtype = w1_ref.dtype
    x = x_ref[...].astype(w_dtype)

    # Layer 1: [TB, S] @ [S, 128] + [1, 128] -> relu
    h1 = jnp.dot(x, w1_ref[...], preferred_element_type=jnp.float32) + b1_ref[...]
    h1 = jnp.maximum(h1, 0.0)

    # Layer 2: [TB, 128] @ [128, 128] + [1, 128] -> relu
    h2 = jnp.dot(h1.astype(w_dtype), w2_ref[...],
                 preferred_element_type=jnp.float32) + b2_ref[...]
    h2 = jnp.maximum(h2, 0.0)

    # Layer 3: [TB, 128] @ [128, A] + [1, A]  (no activation)
    # TODO(synk): if a bundle dump ever shows ld/st saturation from spilled
    # (TB,128) intermediates at very large TB, wrap this body in an unrolled
    # lax.fori_loop over 128-row sub-chunks to bound live ranges.
    out = jnp.dot(h2.astype(w_dtype), w3_ref[...],
                  preferred_element_type=jnp.float32) + b3_ref[...]
    o_ref[...] = out.astype(o_ref.dtype)


def prepare_params(params, weight_dtype=jnp.float32):
    """One-time parameter preparation (hoisted out of the per-call path).

    Casts weights to the MXU input dtype (bf16 is beneficial on v5e/v6e/v7x);
    biases stay f32 since they are added post-accumulation.
    """
    w1, b1, w2, b2, w3, b3 = params
    return (w1.astype(weight_dtype), b1.astype(jnp.float32),
            w2.astype(weight_dtype), b2.astype(jnp.float32),
            w3.astype(weight_dtype), b3.astype(jnp.float32))


@functools.partial(jax.jit, static_argnames=("block_batch",))
def q_forward(x, params, block_batch=512):
    """Q-network forward. x: [batch, state] f32 -> [batch, action] f32."""
    w1, b1, w2, b2, w3, b3 = params
    batch, state = x.shape
    hidden = w1.shape[1]
    action = w3.shape[1]

    # Batch tile: multiple of 8 (sublane), capped at block_batch, and sized to
    # ~half the batch so big batches always yield >=2 grid steps (v7x megacore
    # sharding).  Partial last blocks are handled by Pallas (masked writes;
    # rows are independent, so padded garbage rows never reach HBM).
    tb = max(8, min(block_batch, _round_up(pl.cdiv(batch, 2), 8)))
    grid = (pl.cdiv(batch, tb),)

    const2 = lambda i: (0, 0)  # weights/biases: same block every step -> resident

    out = pl.pallas_call(
        q_mlp_kernel,
        out_shape=jax.ShapeDtypeStruct((batch, action), jnp.float32),
        grid=grid,
        in_specs=[
            pl.BlockSpec((tb, state), lambda i: (i, 0)),   # x tile
            pl.BlockSpec((state, hidden), const2),         # w1
            pl.BlockSpec((1, hidden), const2),             # b1
            pl.BlockSpec((hidden, hidden), const2),        # w2
            pl.BlockSpec((1, hidden), const2),             # b2
            pl.BlockSpec((hidden, action), const2),        # w3
            pl.BlockSpec((1, action), const2),             # b3
        ],
        out_specs=pl.BlockSpec((tb, action), lambda i: (i, 0)),
        compiler_params=pltpu.CompilerParams(
            dimension_semantics=("parallel",),  # shard batch tiles across TCs
        ),
    )(x, w1, b1, w2, b2, w3, b3)

    return out


def init_linear_params(key, in_features, out_features):
    """PyTorch-style Linear init: U(-1/sqrt(in), 1/sqrt(in)).

    Returns weight as [in_features, out_features] (transposed for x @ W) and
    bias as [1, out_features].
    """
    kw, kb = jax.random.split(key)
    bound = 1.0 / math.sqrt(in_features)
    w = jax.random.uniform(kw, (in_features, out_features), jnp.float32,
                           minval=-bound, maxval=bound)
    b = jax.random.uniform(kb, (1, out_features), jnp.float32,
                           minval=-bound, maxval=bound)
    return w, b


def make_q_params(key, action_size, state_size):
    k1, k2, k3 = jax.random.split(key, 3)
    w1, b1 = init_linear_params(k1, state_size, HIDDEN)
    w2, b2 = init_linear_params(k2, HIDDEN, HIDDEN)
    w3, b3 = init_linear_params(k3, HIDDEN, action_size)
    return (w1, b1, w2, b2, w3, b3)


if __name__ == "__main__":
    action_size = 4
    state_size = 32
    batch = 8

    root = jax.random.PRNGKey(0)
    k_params, k_x = jax.random.split(root)

    raw_params = make_q_params(k_params, action_size, state_size)
    x = jax.random.normal(k_x, (batch, state_size), jnp.float32)

    # Reference in plain JAX (same math as the PyTorch module).
    w1, b1, w2, b2, w3, b3 = raw_params
    h = jnp.maximum(x @ w1 + b1, 0.0)
    h = jnp.maximum(h @ w2 + b2, 0.0)
    ref = h @ w3 + b3

    # f32 weight path (exact).
    params_f32 = prepare_params(raw_params, jnp.float32)
    out = q_forward(x, params_f32)
    jax.block_until_ready(out)
    assert out.shape == (batch, action_size)
    assert jnp.allclose(out, ref, atol=1e-5, rtol=1e-5)

    # bf16 weight path (MXU fast path on all generations); f32 accumulation,
    # looser tolerance since activations are also cast to bf16 before each dot.
    params_bf16 = prepare_params(raw_params, jnp.bfloat16)
    out_bf16 = q_forward(x, params_bf16)
    jax.block_until_ready(out_bf16)
    assert out_bf16.shape == (batch, action_size)
    assert jnp.allclose(out_bf16, ref, atol=5e-2, rtol=5e-2)

    print("KERNEL_OK")
</pallas_src>

<mosaic_0001>
module attributes {stable_mosaic.version = 11 : i64} {
  func.func @q_mlp_kernel(%arg0: i32, %arg1: memref<8x32xf32, #tpu.memory_space<vmem>>, %arg2: memref<32x128xf32, #tpu.memory_space<vmem>>, %arg3: memref<1x128xf32, #tpu.memory_space<vmem>>, %arg4: memref<128x128xf32, #tpu.memory_space<vmem>>, %arg5: memref<1x128xf32, #tpu.memory_space<vmem>>, %arg6: memref<128x4xf32, #tpu.memory_space<vmem>>, %arg7: memref<1x4xf32, #tpu.memory_space<vmem>>, %arg8: memref<8x4xf32, #tpu.memory_space<vmem>>) attributes {dimension_semantics = [#tpu.dimension_semantics<parallel>], iteration_bounds = array<i64: 1>, scalar_prefetch = 0 : i64, scratch_operands = 0 : i64, tpu.core_type = #tpu.core_type<tc>, window_params = [{transform_indices = @transform_0, window_bounds = array<i64: 8, 32>}, {pipeline_mode = #tpu.pipeline_mode<synchronous>, transform_indices = @transform_1, window_bounds = array<i64: 32, 128>}, {pipeline_mode = #tpu.pipeline_mode<synchronous>, transform_indices = @transform_2, window_bounds = array<i64: 1, 128>}, {pipeline_mode = #tpu.pipeline_mode<synchronous>, transform_indices = @transform_3, window_bounds = array<i64: 128, 128>}, {pipeline_mode = #tpu.pipeline_mode<synchronous>, transform_indices = @transform_4, window_bounds = array<i64: 1, 128>}, {pipeline_mode = #tpu.pipeline_mode<synchronous>, transform_indices = @transform_5, window_bounds = array<i64: 128, 4>}, {pipeline_mode = #tpu.pipeline_mode<synchronous>, transform_indices = @transform_6, window_bounds = array<i64: 1, 4>}, {transform_indices = @transform_7, window_bounds = array<i64: 8, 4>}]} {
    %c0 = arith.constant 0 : index
    %c0_0 = arith.constant 0 : index
    %0 = vector.load %arg1[%c0, %c0_0] : memref<8x32xf32, #tpu.memory_space<vmem>>, vector<8x32xf32>
    %c0_1 = arith.constant 0 : index
    %c0_2 = arith.constant 0 : index
    %1 = vector.load %arg2[%c0_1, %c0_2] : memref<32x128xf32, #tpu.memory_space<vmem>>, vector<32x128xf32>
    %cst = arith.constant dense<0.000000e+00> : vector<8x128xf32>
    %2 = tpu.matmul %0, %1, %cst {dimension_numbers = #tpu.dot_dimension_numbers<[1], [0], [0], [1], [0, 0, 1, 1], [], []>} : vector<8x32xf32>, vector<32x128xf32>, vector<8x128xf32> -> vector<8x128xf32>
    %c0_3 = arith.constant 0 : index
    %c0_4 = arith.constant 0 : index
    %3 = vector.load %arg3[%c0_3, %c0_4] : memref<1x128xf32, #tpu.memory_space<vmem>>, vector<1x128xf32>
    %4 = vector.broadcast %3 : vector<1x128xf32> to vector<8x128xf32>
    %5 = arith.addf %2, %4 : vector<8x128xf32>
    %cst_5 = arith.constant 0.000000e+00 : f32
    %6 = vector.broadcast %cst_5 : f32 to vector<8x128xf32>
    %7 = arith.maximumf %5, %6 : vector<8x128xf32>
    %c0_6 = arith.constant 0 : index
    %c0_7 = arith.constant 0 : index
    %8 = vector.load %arg4[%c0_6, %c0_7] : memref<128x128xf32, #tpu.memory_space<vmem>>, vector<128x128xf32>
    %cst_8 = arith.constant dense<0.000000e+00> : vector<8x128xf32>
    %9 = tpu.matmul %7, %8, %cst_8 {dimension_numbers = #tpu.dot_dimension_numbers<[1], [0], [0], [1], [0, 0, 1, 1], [], []>} : vector<8x128xf32>, vector<128x128xf32>, vector<8x128xf32> -> vector<8x128xf32>
    %c0_9 = arith.constant 0 : index
    %c0_10 = arith.constant 0 : index
    %10 = vector.load %arg5[%c0_9, %c0_10] : memref<1x128xf32, #tpu.memory_space<vmem>>, vector<1x128xf32>
    %11 = vector.broadcast %10 : vector<1x128xf32> to vector<8x128xf32>
    %12 = arith.addf %9, %11 : vector<8x128xf32>
    %cst_11 = arith.constant 0.000000e+00 : f32
    %13 = vector.broadcast %cst_11 : f32 to vector<8x128xf32>
    %14 = arith.maximumf %12, %13 : vector<8x128xf32>
    %c0_12 = arith.constant 0 : index
    %c0_13 = arith.constant 0 : index
    %15 = vector.load %arg6[%c0_12, %c0_13] : memref<128x4xf32, #tpu.memory_space<vmem>>, vector<128x4xf32>
    %cst_14 = arith.constant dense<0.000000e+00> : vector<8x4xf32>
    %16 = tpu.matmul %14, %15, %cst_14 {dimension_numbers = #tpu.dot_dimension_numbers<[1], [0], [0], [1], [0, 0, 1, 1], [], []>} : vector<8x128xf32>, vector<128x4xf32>, vector<8x4xf32> -> vector<8x4xf32>
    %c0_15 = arith.constant 0 : index
    %c0_16 = arith.constant 0 : index
    %17 = vector.load %arg7[%c0_15, %c0_16] : memref<1x4xf32, #tpu.memory_space<vmem>>, vector<1x4xf32>
    %18 = vector.broadcast %17 : vector<1x4xf32> to vector<8x4xf32>
    %19 = arith.addf %16, %18 : vector<8x4xf32>
    %c0_17 = arith.constant 0 : index
    %c0_18 = arith.constant 0 : index
    %20 = vector.load %arg8[%c0_17, %c0_18] : memref<8x4xf32, #tpu.memory_space<vmem>>, vector<8x4xf32>
    tpu.vector_store %arg8[%c0_17, %c0_18], %19 {strides = array<i32>} : memref<8x4xf32, #tpu.memory_space<vmem>>, vector<8x4xf32>,
    return
  }
  func.func @transform_0(%arg0: i32) -> (i32, i32) {
    %c0_i32 = arith.constant 0 : i32
    %c0_i32_0 = arith.constant 0 : i32
    return %arg0, %c0_i32 : i32, i32
  }
  func.func @transform_1(%arg0: i32) -> (i32, i32) {
    %c0_i32 = arith.constant 0 : i32
    %c0_i32_0 = arith.constant 0 : i32
    %c0_i32_1 = arith.constant 0 : i32
    return %c0_i32, %c0_i32_0 : i32, i32
  }
  func.func @transform_2(%arg0: i32) -> (i32, i32) {
    %c0_i32 = arith.constant 0 : i32
    %c0_i32_0 = arith.constant 0 : i32
    %c0_i32_1 = arith.constant 0 : i32
    return %c0_i32, %c0_i32_0 : i32, i32
  }
  func.func @transform_3(%arg0: i32) -> (i32, i32) {
    %c0_i32 = arith.constant 0 : i32
    %c0_i32_0 = arith.constant 0 : i32
    %c0_i32_1 = arith.constant 0 : i32
    return %c0_i32, %c0_i32_0 : i32, i32
  }
  func.func @transform_4(%arg0: i32) -> (i32, i32) {
    %c0_i32 = arith.constant 0 : i32
    %c0_i32_0 = arith.constant 0 : i32
    %c0_i32_1 = arith.constant 0 : i32
    return %c0_i32, %c0_i32_0 : i32, i32
  }
  func.func @transform_5(%arg0: i32) -> (i32, i32) {
    %c0_i32 = arith.constant 0 : i32
    %c0_i32_0 = arith.constant 0 : i32
    %c0_i32_1 = arith.constant 0 : i32
    return %c0_i32, %c0_i32_0 : i32, i32
  }
  func.func @transform_6(%arg0: i32) -> (i32, i32) {
    %c0_i32 = arith.constant 0 : i32
    %c0_i32_0 = arith.constant 0 : i32
    %c0_i32_1 = arith.constant 0 : i32
    return %c0_i32, %c0_i32_0 : i32, i32
  }
  func.func @transform_7(%arg0: i32) -> (i32, i32) {
    %c0_i32 = arith.constant 0 : i32
    %c0_i32_0 = arith.constant 0 : i32
    return %arg0, %c0_i32 : i32, i32
  }
}

</mosaic_0001>

<llo_original>
// kernel: q_forward.1
$region0: #{q_forward.1}
  #allocation0 [shape = 'u32[]', space=smem, size = 0x4, offset = 0x4, fixed_abs, tag = 'smem constant byte address 0x4 - core index']
  #allocation1 [shape = 'u32[144,128]{1,0:T(1,128)}', space=vmem, size = 0x12000, scoped, tag = 'internal scratch']
  %s0 = inlined_call_operand.vmem [shape: f32[8,32], index: 0, kind: input, shape index: {}]
  %s1 = inlined_call_operand.hbm [shape: f32[32,128], index: 1, kind: input, shape index: {}]
  %s2 = inlined_call_operand.vmem [shape: f32[1,128], index: 2, kind: input, shape index: {}]
  %s3 = inlined_call_operand.vmem [shape: f32[128,128], index: 3, kind: input, shape index: {}]
  %s4 = inlined_call_operand.hbm [shape: f32[1,128], index: 4, kind: input, shape index: {}]
  %s5 = inlined_call_operand.vmem [shape: f32[128,4], index: 5, kind: input, shape index: {}]
  %s6 = inlined_call_operand.vmem [shape: f32[1,4], index: 6, kind: input, shape index: {}]
  %s7 = inlined_call_operand.vmem [shape: f32[8,4], index: 7, kind: output, shape index: {}]
  %s8 = sld [smem:[#allocation0]]
  $region46: #{q_forward.1} parent=0
    _
  %s10 = ssub.s32 1, %s8
  %s11 = scalar_select 0, %s10, %s8
  $region1: #{q_forward.1} parent=0
    #allocation2 [shape = 'u8[16384]{0}', space=vmem, size = 0x4000, scoped, tag = 'input window, operand 1, single buffered']
    #allocation3 [shape = 's32[1]{0}', space=sflag, size = 0x4, scoped, tag = 'scoped memory for q_forward.1']
    #allocation4 [shape = 'u8[512]{0}', space=vmem, size = 0x400, scoped, tag = 'input window, operand 4, single buffered']
    #allocation5 [shape = 's32[1]{0}', space=sflag, size = 0x4, scoped, tag = 'scoped memory for q_forward.1']
    %12 = vsyncpa [#allocation3], 0
    %13 = vsyncpa [#allocation5], 0
    // Predicated region
    $region2: #{q_forward.1} parent=1 // pred_check
      _
    $region3: #{q_forward.1} parent=1 // pred_check_branch
      %15 = sbr.rel (0) target = $region5
    $region4: #{q_forward.1} parent=1 // pred_region
      _
    $region5: #{q_forward.1} parent=1 // pred_fallthru
      _
    // Predicated region
    $region6: #{q_forward.1} parent=1 // pred_check
      _
    $region7: #{q_forward.1} parent=1 // pred_check_branch
      %17 = sbr.rel (0) target = $region9
    $region8: #{q_forward.1} parent=1 // pred_region
      %s19 = ssub.s32 512, 512
      %20 = vsyncadd [#allocation3], %s19
      %s21 = sshll.u32 [#allocation2], 4
      %s22 = int_to_ptr.vmem [resolvable:$true] %s21
      %27 = dma.hbm_to_vmem [thread:$0]  %s1, 512, %s22, [#allocation3], 128, 128, 8
    $region9: #{q_forward.1} parent=1 // pred_fallthru
      _
    // Predicated region
    $region10: #{q_forward.1} parent=1 // pred_check
      _
    $region11: #{q_forward.1} parent=1 // pred_check_branch
      %29 = sbr.rel (0) target = $region13
    $region12: #{q_forward.1} parent=1 // pred_region
      _
    $region13: #{q_forward.1} parent=1 // pred_fallthru
      _
    // Predicated region
    $region14: #{q_forward.1} parent=1 // pred_check
      _
    $region15: #{q_forward.1} parent=1 // pred_check_branch
      %31 = sbr.rel (0) target = $region17
    $region16: #{q_forward.1} parent=1 // pred_region
      _
    $region17: #{q_forward.1} parent=1 // pred_fallthru
      _
    // Predicated region
    $region18: #{q_forward.1} parent=1 // pred_check
      _
    $region19: #{q_forward.1} parent=1 // pred_check_branch
      %33 = sbr.rel (0) target = $region21
    $region20: #{q_forward.1} parent=1 // pred_region
      %s35 = ssub.s32 16, 16
      %36 = vsyncadd [#allocation5], %s35
      %s38 = sshll.u32 [#allocation4], 4
      %s39 = int_to_ptr.vmem [resolvable:$true] %s38
      %41 = dma.hbm_to_vmem [thread:$0]  %s4, 16, %s39, [#allocation5]
    $region21: #{q_forward.1} parent=1 // pred_fallthru
      _
    // Predicated region
    $region22: #{q_forward.1} parent=1 // pred_check
      _
    $region23: #{q_forward.1} parent=1 // pred_check_branch
      %43 = sbr.rel (0) target = $region25
    $region24: #{q_forward.1} parent=1 // pred_region
      _
    $region25: #{q_forward.1} parent=1 // pred_fallthru
      _
    // Predicated region
    $region26: #{q_forward.1} parent=1 // pred_check
      _
    $region27: #{q_forward.1} parent=1 // pred_check_branch
      %45 = sbr.rel (0) target = $region29
    $region28: #{q_forward.1} parent=1 // pred_region
      _
    $region29: #{q_forward.1} parent=1 // pred_fallthru
      _
    // Predicated region
    $region30: #{q_forward.1} parent=1 // pred_check
      _
    $region31: #{q_forward.1} parent=1 // pred_check_branch
      %47 = sbr.rel (0) target = $region33
    $region32: #{q_forward.1} parent=1 // pred_region
      %48 = dma.done [#allocation3], 512
    $region33: #{q_forward.1} parent=1 // pred_fallthru
      _
    // Predicated region
    $region34: #{q_forward.1} parent=1 // pred_check
      _
    $region35: #{q_forward.1} parent=1 // pred_check_branch
      %50 = sbr.rel (0) target = $region37
    $region36: #{q_forward.1} parent=1 // pred_region
      %51 = dma.done [#allocation5], 16
    $region37: #{q_forward.1} parent=1 // pred_fallthru
      _
    %v52 = vld [vmem:[%s0] sm:$0xff]
    %v53 = vld [vmem:[#allocation2] sm:$0xff]
    %v54 = vld [vmem:[#allocation2 + $0x8] sm:$0xff]
    %v55 = vld [vmem:[#allocation2 + $0x10] sm:$0xff]
    %v56 = vld [vmem:[#allocation2 + $0x18] sm:$0xff]
    %v57 = vld [vmem:[%s2] sm:$0x1]
    %v59 = vlaneseq
    %v60 = vshrl.u32 %v59, 7
    %v61 = vsub.s32 0, %v60
    %v62 = vrot.slane %v57, %v61
    %vm64 = vcmask 261120
    %v66 = vsel %vm64, %v52, 0
    %68 = vmatprep.subr.mxu0 0.0
    %69 = vmatpush1.msra.mxu0 0.0
    %70 = vmatprep.subr.mxu0 0.0
    %71 = vmatpush1.msra.mxu0 0.0
    %72 = vmatprep.subr.mxu0 0.0
    %73 = vmatpush1.msra.mxu0 0.0
    %74 = vmatprep.subr.mxu0 0.0
    %75 = vmatpush1.msra.mxu0 0.0
    %76 = vmatprep.subr.mxu0 0.0
    %77 = vmatpush1.msra.mxu0 0.0
    %78 = vmatprep.subr.mxu0 0.0
    %79 = vmatpush1.msra.mxu0 0.0
    %80 = vmatprep.subr.mxu0 0.0
    %81 = vmatpush1.msra.mxu0 0.0
    %82 = vmatprep.subr.mxu0 0.0
    %83 = vmatpush1.msra.mxu0 0.0
    %84 = vmatprep.subr.mxu0 0.0
    %85 = vmatpush1.msra.mxu0 0.0
    %86 = vmatprep.subr.mxu0 0.0
    %87 = vmatpush1.msra.mxu0 0.0
    %88 = vmatprep.subr.mxu0 0.0
    %89 = vmatpush1.msra.mxu0 0.0
    %90 = vmatprep.subr.mxu0 0.0
    %91 = vmatpush1.msra.mxu0 0.0
    %92 = vmatprep.subr.mxu0 0.0
    %93 = vmatpush1.msra.mxu0 %v56
    %94 = vmatprep.subr.mxu0 0.0
    %95 = vmatpush1.msra.mxu0 %v55
    %96 = vmatprep.subr.mxu0 0.0
    %97 = vmatpush1.msra.mxu0 %v54
    %98 = vmatprep.subr.mxu0 0.0
    %99 = vmatpush1.msra.mxu0 %v53
    %100 = vmatprep.subr.mxu0 0.0
    %101 = vmatpush2.msra.mxu0 0.0
    %102 = vmatprep.subr.mxu0 0.0
    %103 = vmatpush2.msra.mxu0 0.0
    %104 = vmatprep.subr.mxu0 0.0
    %105 = vmatpush2.msra.mxu0 0.0
    %106 = vmatprep.subr.mxu0 0.0
    %107 = vmatpush2.msra.mxu0 0.0
    %108 = vmatprep.subr.mxu0 0.0
    %109 = vmatpush2.msra.mxu0 0.0
    %110 = vmatprep.subr.mxu0 0.0
    %111 = vmatpush2.msra.mxu0 0.0
    %112 = vmatprep.subr.mxu0 0.0
    %113 = vmatpush2.msra.mxu0 0.0
    %114 = vmatprep.subr.mxu0 0.0
    %115 = vmatpush2.msra.mxu0 0.0
    %116 = vmatprep.subr.mxu0 0.0
    %117 = vmatpush2.msra.mxu0 0.0
    %118 = vmatprep.subr.mxu0 0.0
    %119 = vmatpush2.msra.mxu0 0.0
    %120 = vmatprep.subr.mxu0 0.0
    %121 = vmatpush2.msra.mxu0 0.0
    %122 = vmatprep.subr.mxu0 0.0
    %123 = vmatpush2.msra.mxu0 0.0
    %124 = vmatprep.subr.mxu0 0.0
    %125 = vmatpush2.msra.mxu0 0.0
    %126 = vmatprep.subr.mxu0 0.0
    %127 = vmatpush2.msra.mxu0 0.0
    %128 = vmatprep.subr.mxu0 0.0
    %129 = vmatpush2.msra.mxu0 0.0
    %130 = vmatprep.subr.mxu0 0.0
    %131 = vmatpush2.msra.mxu0 0.0
    %132 = vmatprep.mubr.f32.mxu0 0.0
    %133 = vmatmul.mubr.f32.gmra.mxu0 %v66
    %v134 = vpop.f32.mrf.mxu0
    %v135 = vadd.f32 %v62, %v134
    %v136 = vpop.f32.mrf.mxu0
    %137 = vdwg.mxu0
    %v138 = vmax.f32 %v135, 0.0
    %v139 = vld [vmem:[%s3] sm:$0xff]
    %v140 = vld [vmem:[%s3 + $0x8] sm:$0xff]
    %v141 = vld [vmem:[%s3 + $0x10] sm:$0xff]
    %v142 = vld [vmem:[%s3 + $0x18] sm:$0xff]
    %v143 = vld [vmem:[%s3 + $0x20] sm:$0xff]
    %v144 = vld [vmem:[%s3 + $0x28] sm:$0xff]
    %v145 = vld [vmem:[%s3 + $0x30] sm:$0xff]
    %v146 = vld [vmem:[%s3 + $0x38] sm:$0xff]
    %v147 = vld [vmem:[%s3 + $0x40] sm:$0xff]
    %v148 = vld [vmem:[%s3 + $0x48] sm:$0xff]
    %v149 = vld [vmem:[%s3 + $0x50] sm:$0xff]
    %v150 = vld [vmem:[%s3 + $0x58] sm:$0xff]
    %v151 = vld [vmem:[%s3 + $0x60] sm:$0xff]
    %v152 = vld [vmem:[%s3 + $0x68] sm:$0xff]
    %v153 = vld [vmem:[%s3 + $0x70] sm:$0xff]
    %v154 = vld [vmem:[%s3 + $0x78] sm:$0xff]
    %v155 = vld [vmem:[#allocation4] sm:$0x1]
    %v157 = vlaneseq
    %v158 = vshrl.u32 %v157, 7
    %v159 = vsub.s32 0, %v158
    %v160 = vrot.slane %v155, %v159
    %162 = vmatprep.subr.mxu0 0.0
    %163 = vmatpush1.msra.mxu0 %v154
    %164 = vmatprep.subr.mxu0 0.0
    %165 = vmatpush1.msra.mxu0 %v153
    %166 = vmatprep.subr.mxu0 0.0
    %167 = vmatpush1.msra.mxu0 %v152
    %168 = vmatprep.subr.mxu0 0.0
    %169 = vmatpush1.msra.mxu0 %v151
    %170 = vmatprep.subr.mxu0 0.0
    %171 = vmatpush1.msra.mxu0 %v150
    %172 = vmatprep.subr.mxu0 0.0
    %173 = vmatpush1.msra.mxu0 %v149
    %174 = vmatprep.subr.mxu0 0.0
    %175 = vmatpush1.msra.mxu0 %v148
    %176 = vmatprep.subr.mxu0 0.0
    %177 = vmatpush1.msra.mxu0 %v147
    %178 = vmatprep.subr.mxu0 0.0
    %179 = vmatpush1.msra.mxu0 %v146
    %180 = vmatprep.subr.mxu0 0.0
    %181 = vmatpush1.msra.mxu0 %v145
    %182 = vmatprep.subr.mxu0 0.0
    %183 = vmatpush1.msra.mxu0 %v144
    %184 = vmatprep.subr.mxu0 0.0
    %185 = vmatpush1.msra.mxu0 %v143
    %186 = vmatprep.subr.mxu0 0.0
    %187 = vmatpush1.msra.mxu0 %v142
    %188 = vmatprep.subr.mxu0 0.0
    %189 = vmatpush1.msra.mxu0 %v141
    %190 = vmatprep.subr.mxu0 0.0
    %191 = vmatpush1.msra.mxu0 %v140
    %192 = vmatprep.subr.mxu0 0.0
    %193 = vmatpush1.msra.mxu0 %v139
    %194 = vmatprep.subr.mxu0 0.0
    %195 = vmatpush2.msra.mxu0 0.0
    %196 = vmatprep.subr.mxu0 0.0
    %197 = vmatpush2.msra.mxu0 0.0
    %198 = vmatprep.subr.mxu0 0.0
    %199 = vmatpush2.msra.mxu0 0.0
    %200 = vmatprep.subr.mxu0 0.0
    %201 = vmatpush2.msra.mxu0 0.0
    %202 = vmatprep.subr.mxu0 0.0
    %203 = vmatpush2.msra.mxu0 0.0
    %204 = vmatprep.subr.mxu0 0.0
    %205 = vmatpush2.msra.mxu0 0.0
    %206 = vmatprep.subr.mxu0 0.0
    %207 = vmatpush2.msra.mxu0 0.0
    %208 = vmatprep.subr.mxu0 0.0
    %209 = vmatpush2.msra.mxu0 0.0
    %210 = vmatprep.subr.mxu0 0.0
    %211 = vmatpush2.msra.mxu0 0.0
    %212 = vmatprep.subr.mxu0 0.0
    %213 = vmatpush2.msra.mxu0 0.0
    %214 = vmatprep.subr.mxu0 0.0
    %215 = vmatpush2.msra.mxu0 0.0
    %216 = vmatprep.subr.mxu0 0.0
    %217 = vmatpush2.msra.mxu0 0.0
    %218 = vmatprep.subr.mxu0 0.0
    %219 = vmatpush2.msra.mxu0 0.0
    %220 = vmatprep.subr.mxu0 0.0
    %221 = vmatpush2.msra.mxu0 0.0
    %222 = vmatprep.subr.mxu0 0.0
    %223 = vmatpush2.msra.mxu0 0.0
    %224 = vmatprep.subr.mxu0 0.0
    %225 = vmatpush2.msra.mxu0 0.0
    %226 = vmatprep.mubr.f32.mxu0 0.0
    %227 = vmatmul.mubr.f32.gmra.mxu0 %v138
    %v228 = vpop.f32.mrf.mxu0
    %v229 = vadd.f32 %v160, %v228
    %v230 = vpop.f32.mrf.mxu0
    %231 = vdwg.mxu0
    %v232 = vmax.f32 %v229, 0.0
    %v233 = vld [vmem:[%s5] sm:$0xff]
    %v234 = vld [vmem:[%s5 + $0x8] sm:$0xff]
    %v235 = vld [vmem:[%s5 + $0x10] sm:$0xff]
    %v236 = vld [vmem:[%s5 + $0x18] sm:$0xff]
    %v237 = vld [vmem:[%s5 + $0x20] sm:$0xff]
    %v238 = vld [vmem:[%s5 + $0x28] sm:$0xff]
    %v239 = vld [vmem:[%s5 + $0x30] sm:$0xff]
    %v240 = vld [vmem:[%s5 + $0x38] sm:$0xff]
    %v241 = vld [vmem:[%s5 + $0x40] sm:$0xff]
    %v242 = vld [vmem:[%s5 + $0x48] sm:$0xff]
    %v243 = vld [vmem:[%s5 + $0x50] sm:$0xff]
    %v244 = vld [vmem:[%s5 + $0x58] sm:$0xff]
    %v245 = vld [vmem:[%s5 + $0x60] sm:$0xff]
    %v246 = vld [vmem:[%s5 + $0x68] sm:$0xff]
    %v247 = vld [vmem:[%s5 + $0x70] sm:$0xff]
    %v248 = vld [vmem:[%s5 + $0x78] sm:$0xff]
    %v249 = vld [vmem:[%s6] sm:$0x1]
    %v251 = vlaneseq
    %v252 = vshrl.u32 %v251, 7
    %v253 = vsub.s32 0, %v252
    %v254 = vrot.slane %v249, %v253
    %256 = vmatprep.subr.mxu0 0.0
    %257 = vmatpush1.msra.mxu0 %v248
    %258 = vmatprep.subr.mxu0 0.0
    %259 = vmatpush1.msra.mxu0 %v247
    %260 = vmatprep.subr.mxu0 0.0
    %261 = vmatpush1.msra.mxu0 %v246
    %262 = vmatprep.subr.mxu0 0.0
    %263 = vmatpush1.msra.mxu0 %v245
    %264 = vmatprep.subr.mxu0 0.0
    %265 = vmatpush1.msra.mxu0 %v244
    %266 = vmatprep.subr.mxu0 0.0
    %267 = vmatpush1.msra.mxu0 %v243
    %268 = vmatprep.subr.mxu0 0.0
    %269 = vmatpush1.msra.mxu0 %v242
    %270 = vmatprep.subr.mxu0 0.0
    %271 = vmatpush1.msra.mxu0 %v241
    %272 = vmatprep.subr.mxu0 0.0
    %273 = vmatpush1.msra.mxu0 %v240
    %274 = vmatprep.subr.mxu0 0.0
    %275 = vmatpush1.msra.mxu0 %v239
    %276 = vmatprep.subr.mxu0 0.0
    %277 = vmatpush1.msra.mxu0 %v238
    %278 = vmatprep.subr.mxu0 0.0
    %279 = vmatpush1.msra.mxu0 %v237
    %280 = vmatprep.subr.mxu0 0.0
    %281 = vmatpush1.msra.mxu0 %v236
    %282 = vmatprep.subr.mxu0 0.0
    %283 = vmatpush1.msra.mxu0 %v235
    %284 = vmatprep.subr.mxu0 0.0
    %285 = vmatpush1.msra.mxu0 %v234
    %286 = vmatprep.subr.mxu0 0.0
    %287 = vmatpush1.msra.mxu0 %v233
    %288 = vmatprep.subr.mxu0 0.0
    %289 = vmatpush2.msra.mxu0 0.0
    %290 = vmatprep.subr.mxu0 0.0
    %291 = vmatpush2.msra.mxu0 0.0
    %292 = vmatprep.subr.mxu0 0.0
    %293 = vmatpush2.msra.mxu0 0.0
    %294 = vmatprep.subr.mxu0 0.0
    %295 = vmatpush2.msra.mxu0 0.0
    %296 = vmatprep.subr.mxu0 0.0
    %297 = vmatpush2.msra.mxu0 0.0
    %298 = vmatprep.subr.mxu0 0.0
    %299 = vmatpush2.msra.mxu0 0.0
    %300 = vmatprep.subr.mxu0 0.0
    %301 = vmatpush2.msra.mxu0 0.0
    %302 = vmatprep.subr.mxu0 0.0
    %303 = vmatpush2.msra.mxu0 0.0
    %304 = vmatprep.subr.mxu0 0.0
    %305 = vmatpush2.msra.mxu0 0.0
    %306 = vmatprep.subr.mxu0 0.0
    %307 = vmatpush2.msra.mxu0 0.0
    %308 = vmatprep.subr.mxu0 0.0
    %309 = vmatpush2.msra.mxu0 0.0
    %310 = vmatprep.subr.mxu0 0.0
    %311 = vmatpush2.msra.mxu0 0.0
    %312 = vmatprep.subr.mxu0 0.0
    %313 = vmatpush2.msra.mxu0 0.0
    %314 = vmatprep.subr.mxu0 0.0
    %315 = vmatpush2.msra.mxu0 0.0
    %316 = vmatprep.subr.mxu0 0.0
    %317 = vmatpush2.msra.mxu0 0.0
    %318 = vmatprep.subr.mxu0 0.0
    %319 = vmatpush2.msra.mxu0 0.0
    %320 = vmatprep.mubr.f32.mxu0 0.0
    %321 = vmatmul.mubr.f32.gmra.mxu0 %v232
    %v322 = vpop.f32.mrf.mxu0
    %v323 = vadd.f32 %v254, %v322
    %v324 = vpop.f32.mrf.mxu0
    %325 = vdwg.mxu0
    %vm326 = vcmask 31744
    %327 = vst.msk [vmem:[%s7] sm:$0xff] %vm326, %v323
    // Predicated region
    $region38: #{q_forward.1} parent=1 // pred_check
      _
    $region39: #{q_forward.1} parent=1 // pred_check_branch
      %329 = sbr.rel (0) target = $region41
    $region40: #{q_forward.1} parent=1 // pred_region
      _
    $region41: #{q_forward.1} parent=1 // pred_fallthru
      _
    // Predicated region
    $region42: #{q_forward.1} parent=1 // pred_check
      _
    $region43: #{q_forward.1} parent=1 // pred_check_branch
      %331 = sbr.rel (0) target = $region45
    $region44: #{q_forward.1} parent=1 // pred_region
      _
    $region45: #{q_forward.1} parent=1 // pred_fallthru
      _
    %332 = vsyncpa [#allocation3], 1
    %333 = vsyncpa [#allocation5], 1

</llo_original>
